<compile_context>
chip_gen: v5e
topology: v5e:2x2
jax: 0.10.0
libtpu: 0.0.40
codegen_flags: <defaults>
</compile_context>

<pallas_src>
import jax
import jax.numpy as jnp
from jax.experimental import pallas as pl
from jax.experimental.pallas import tpu as pltpu

LANE = 128   # padded output width of every layer (lane-dense vregs & stores)


def _round_up(n, m):
    return ((n + m - 1) // m) * m


def _tb_max():
    """Batch-tile cap per generation, sized against VMEM capacity."""
    try:
        vmem = pltpu.get_tpu_info().vmem_capacity_bytes
    except Exception:                      # unknown part / query unavailable
        vmem = 64 << 20                    # assume the smallest (v7x-like) VMEM
    # 128 MiB parts (v5e/v6e) comfortably take 4096-row f32 tiles; 64 MiB
    # parts (v7x) get 2048 to leave headroom for the compiler's temporaries.
    return 4096 if vmem > (96 << 20) else 2048


def fcn_kernel(x_ref, w1_ref, w23_ref, b_ref, o_ref):
    # x arrives f32 straight from HBM; cast to bf16 here (MXU operands) so the
    # wrapper never runs a separate cast/pad pass over x.
    x = x_ref[...].astype(jnp.bfloat16)
    b = b_ref[...]
    # Layer 1: Linear(784 -> 30, cols zero-padded to 128) + clamp(min=0).
    h1 = jnp.dot(x, w1_ref[...], preferred_element_type=jnp.float32)
    h1 = jnp.maximum(h1 + b[0:1, :], 0.0)
    # Layer 2: Linear(30 -> 20), zero-padded to 128x128, + clamp(min=0).
    h2 = jnp.dot(h1.astype(jnp.bfloat16), w23_ref[:, 0:LANE],
                 preferred_element_type=jnp.float32)
    h2 = jnp.maximum(h2 + b[1:2, :], 0.0)
    # Layer 3: Linear(20 -> 10), zero-padded to 128x128, no activation.
    h3 = jnp.dot(h2.astype(jnp.bfloat16), w23_ref[:, LANE:2 * LANE],
                 preferred_element_type=jnp.float32)
    # bf16, lane-dense (128-wide) unmasked store; padded lanes are exactly 0.
    o_ref[...] = (h3 + b[2:3, :]).astype(o_ref.dtype)


def _pad2d(a, rows, cols):
    return jnp.pad(a, ((0, rows - a.shape[0]), (0, cols - a.shape[1])))


def _pack_params(params):
    """Pad layers to 128 lanes, pack w2+w3 and the biases, cast weights to bf16."""
    w1 = _pad2d(params["w1"], params["w1"].shape[0], LANE).astype(jnp.bfloat16)
    w2 = _pad2d(params["w2"], LANE, LANE)
    w3 = _pad2d(params["w3"], LANE, LANE)
    w23 = jnp.concatenate([w2, w3], axis=1).astype(jnp.bfloat16)    # [128, 256]
    b = jnp.concatenate([
        _pad2d(params["b1"], 1, LANE),
        _pad2d(params["b2"], 1, LANE),
        _pad2d(params["b3"], 1, LANE),
    ], axis=0).astype(jnp.float32)                                   # [3, 128]
    return w1, w23, b


def fcn_forward(x, params):
    """x: [B, 784] float32. Returns [B, 10] float32."""
    B, F = x.shape
    n_out = params["b3"].shape[1]
    w1, w23, b = _pack_params(params)

    # Batch tile: multiple of 8 (f32 sublane tile), capped per VMEM capacity.
    TB = min(_tb_max(), _round_up(B, 8))
    grid = (pl.cdiv(B, TB),)

    # Accurate VMEM footprint (x is lane-padded 784 -> 896 inside VMEM).
    F_pad = _round_up(F, LANE)
    vmem_bytes = (
        2 * TB * F_pad * 4                 # f32 x tiles, double-buffered
        + TB * F_pad * 2                   # in-kernel bf16 copy of the x tile
        + 2 * TB * LANE * 2                # bf16 output tiles, double-buffered
        + 6 * TB * LANE * 4                # f32/bf16 intermediate activations
        + 2 * (w1.size * 2 + w23.size * 2 + 8 * LANE * 4)  # resident params (x2)
    )
    vmem_limit = max(int(vmem_bytes * 5 // 4), 4 << 20)

    out = pl.pallas_call(
        fcn_kernel,
        out_shape=jax.ShapeDtypeStruct((B, LANE), jnp.bfloat16),
        grid=grid,
        in_specs=[
            pl.BlockSpec((TB, F), lambda i: (i, 0)),     # x: tiled over batch
            pl.BlockSpec(w1.shape, lambda i: (0, 0)),    # weights: VMEM resident
            pl.BlockSpec(w23.shape, lambda i: (0, 0)),
            pl.BlockSpec(b.shape, lambda i: (0, 0)),
        ],
        out_specs=pl.BlockSpec((TB, LANE), lambda i: (i, 0)),
        compiler_params=pltpu.CompilerParams(
            dimension_semantics=("parallel",),
            vmem_limit_bytes=vmem_limit,
        ),
    )(x, w1, w23, b)

    return out[:B, :n_out].astype(jnp.float32)


def init_params(key):
    """Deterministic init mimicking nn.Linear's uniform(-1/sqrt(fan_in), ...).

    PyTorch stores W as [out, in]; we keep the transposed [in, out] layout so
    each layer is y = x @ W + b.
    """
    def linear(key, fan_in, fan_out):
        kw, kb = jax.random.split(key)
        bound = 1.0 / jnp.sqrt(jnp.float32(fan_in))
        w = jax.random.uniform(kw, (fan_in, fan_out), jnp.float32, -bound, bound)
        b = jax.random.uniform(kb, (1, fan_out), jnp.float32, -bound, bound)
        return w, b

    k1, k2, k3 = jax.random.split(key, 3)
    w1, b1 = linear(k1, 784, 30)
    w2, b2 = linear(k2, 30, 20)
    w3, b3 = linear(k3, 20, 10)
    return {"w1": w1, "b1": b1, "w2": w2, "b2": b2, "w3": w3, "b3": b3}


def fcn_reference_f32(x, params):
    h = jnp.maximum(x @ params["w1"] + params["b1"], 0.0)
    h = jnp.maximum(h @ params["w2"] + params["b2"], 0.0)
    return h @ params["w3"] + params["b3"]


def fcn_reference_bf16(x, params):
    """Mirrors the kernel's dtype flow (bf16 matmul operands, f32 accumulate)."""
    bf = jnp.bfloat16
    h = jnp.dot(x.astype(bf), params["w1"].astype(bf),
                preferred_element_type=jnp.float32) + params["b1"]
    h = jnp.maximum(h, 0.0)
    h = jnp.dot(h.astype(bf), params["w2"].astype(bf),
                preferred_element_type=jnp.float32) + params["b2"]
    h = jnp.maximum(h, 0.0)
    return jnp.dot(h.astype(bf), params["w3"].astype(bf),
                   preferred_element_type=jnp.float32) + params["b3"]


if __name__ == "__main__":
    key = jax.random.PRNGKey(0)
    k_param, k_x = jax.random.split(key)

    params = init_params(k_param)
    B = 8
    x = jax.random.normal(k_x, (B, 784), dtype=jnp.float32)

    out = fcn_forward(x, params)
    out = jax.block_until_ready(out)
    assert out.shape == (B, 10)

    # Tight check against a reference with identical dtype flow (bf16 operands,
    # f32 accumulate, bf16 final store).
    ref_bf16 = fcn_reference_bf16(x, params)
    ref_bf16 = ref_bf16.astype(jnp.bfloat16).astype(jnp.float32)
    assert jnp.allclose(out, ref_bf16, atol=2e-3, rtol=2e-3)

    # Loose check against the pure-f32 PyTorch-equivalent forward.
    ref_f32 = fcn_reference_f32(x, params)
    assert jnp.allclose(out, ref_f32, atol=5e-2, rtol=5e-2)

    print("KERNEL_OK")
</pallas_src>

<mosaic_0001>
module attributes {stable_mosaic.version = 11 : i64} {
  func.func @fcn_kernel(%arg0: i32, %arg1: memref<8x784xf32, #tpu.memory_space<vmem>>, %arg2: memref<784x128xbf16, #tpu.memory_space<vmem>>, %arg3: memref<128x256xbf16, #tpu.memory_space<vmem>>, %arg4: memref<3x128xf32, #tpu.memory_space<vmem>>, %arg5: memref<8x128xbf16, #tpu.memory_space<vmem>>) attributes {dimension_semantics = [#tpu.dimension_semantics<parallel>], iteration_bounds = array<i64: 1>, scalar_prefetch = 0 : i64, scratch_operands = 0 : i64, tpu.core_type = #tpu.core_type<tc>, window_params = [{transform_indices = @transform_0, window_bounds = array<i64: 8, 784>}, {pipeline_mode = #tpu.pipeline_mode<synchronous>, transform_indices = @transform_1, window_bounds = array<i64: 784, 128>}, {pipeline_mode = #tpu.pipeline_mode<synchronous>, transform_indices = @transform_2, window_bounds = array<i64: 128, 256>}, {pipeline_mode = #tpu.pipeline_mode<synchronous>, transform_indices = @transform_3, window_bounds = array<i64: 3, 128>}, {transform_indices = @transform_4, window_bounds = array<i64: 8, 128>}]} {
    %c0 = arith.constant 0 : index
    %c0_0 = arith.constant 0 : index
    %0 = vector.load %arg1[%c0, %c0_0] : memref<8x784xf32, #tpu.memory_space<vmem>>, vector<8x784xf32>
    %1 = arith.truncf %0 : vector<8x784xf32> to vector<8x784xbf16>
    %c0_1 = arith.constant 0 : index
    %c0_2 = arith.constant 0 : index
    %2 = vector.load %arg4[%c0_1, %c0_2] : memref<3x128xf32, #tpu.memory_space<vmem>>, vector<3x128xf32>
    %c0_3 = arith.constant 0 : index
    %c0_4 = arith.constant 0 : index
    %3 = vector.load %arg2[%c0_3, %c0_4] : memref<784x128xbf16, #tpu.memory_space<vmem>>, vector<784x128xbf16>
    %cst = arith.constant dense<0.000000e+00> : vector<8x128xf32>
    %4 = tpu.matmul %1, %3, %cst {dimension_numbers = #tpu.dot_dimension_numbers<[1], [0], [0], [1], [0, 0, 1, 1], [], []>} : vector<8x784xbf16>, vector<784x128xbf16>, vector<8x128xf32> -> vector<8x128xf32>
    %5 = vector.extract_strided_slice %2 {offsets = [0, 0], sizes = [1, 128], strides = [1, 1]} : vector<3x128xf32> to vector<1x128xf32>
    %6 = vector.broadcast %5 : vector<1x128xf32> to vector<8x128xf32>
    %7 = arith.addf %4, %6 : vector<8x128xf32>
    %cst_5 = arith.constant 0.000000e+00 : f32
    %8 = vector.broadcast %cst_5 : f32 to vector<8x128xf32>
    %9 = arith.maximumf %7, %8 : vector<8x128xf32>
    %10 = arith.truncf %9 : vector<8x128xf32> to vector<8x128xbf16>
    %c0_6 = arith.constant 0 : index
    %c0_7 = arith.constant 0 : index
    %11 = vector.load %arg3[%c0_6, %c0_7] : memref<128x256xbf16, #tpu.memory_space<vmem>>, vector<128x128xbf16>
    %cst_8 = arith.constant dense<0.000000e+00> : vector<8x128xf32>
    %12 = tpu.matmul %10, %11, %cst_8 {dimension_numbers = #tpu.dot_dimension_numbers<[1], [0], [0], [1], [0, 0, 1, 1], [], []>} : vector<8x128xbf16>, vector<128x128xbf16>, vector<8x128xf32> -> vector<8x128xf32>
    %13 = vector.extract_strided_slice %2 {offsets = [1, 0], sizes = [1, 128], strides = [1, 1]} : vector<3x128xf32> to vector<1x128xf32>
    %14 = vector.broadcast %13 : vector<1x128xf32> to vector<8x128xf32>
    %15 = arith.addf %12, %14 : vector<8x128xf32>
    %cst_9 = arith.constant 0.000000e+00 : f32
    %16 = vector.broadcast %cst_9 : f32 to vector<8x128xf32>
    %17 = arith.maximumf %15, %16 : vector<8x128xf32>
    %18 = arith.truncf %17 : vector<8x128xf32> to vector<8x128xbf16>
    %c0_10 = arith.constant 0 : index
    %c128 = arith.constant 128 : index
    %19 = vector.load %arg3[%c0_10, %c128] : memref<128x256xbf16, #tpu.memory_space<vmem>>, vector<128x128xbf16>
    %cst_11 = arith.constant dense<0.000000e+00> : vector<8x128xf32>
    %20 = tpu.matmul %18, %19, %cst_11 {dimension_numbers = #tpu.dot_dimension_numbers<[1], [0], [0], [1], [0, 0, 1, 1], [], []>} : vector<8x128xbf16>, vector<128x128xbf16>, vector<8x128xf32> -> vector<8x128xf32>
    %21 = vector.extract_strided_slice %2 {offsets = [2, 0], sizes = [1, 128], strides = [1, 1]} : vector<3x128xf32> to vector<1x128xf32>
    %22 = vector.broadcast %21 : vector<1x128xf32> to vector<8x128xf32>
    %23 = arith.addf %20, %22 : vector<8x128xf32>
    %24 = arith.truncf %23 : vector<8x128xf32> to vector<8x128xbf16>
    %c0_12 = arith.constant 0 : index
    %c0_13 = arith.constant 0 : index
    %25 = vector.load %arg5[%c0_12, %c0_13] : memref<8x128xbf16, #tpu.memory_space<vmem>>, vector<8x128xbf16>
    tpu.vector_store %arg5[%c0_12, %c0_13], %24 {strides = array<i32>} : memref<8x128xbf16, #tpu.memory_space<vmem>>, vector<8x128xbf16>,
    return
  }
  func.func @transform_0(%arg0: i32) -> (i32, i32) {
    %c0_i32 = arith.constant 0 : i32
    %c0_i32_0 = arith.constant 0 : i32
    return %arg0, %c0_i32 : i32, i32
  }
  func.func @transform_1(%arg0: i32) -> (i32, i32) {
    %c0_i32 = arith.constant 0 : i32
    %c0_i32_0 = arith.constant 0 : i32
    %c0_i32_1 = arith.constant 0 : i32
    return %c0_i32, %c0_i32_0 : i32, i32
  }
  func.func @transform_2(%arg0: i32) -> (i32, i32) {
    %c0_i32 = arith.constant 0 : i32
    %c0_i32_0 = arith.constant 0 : i32
    %c0_i32_1 = arith.constant 0 : i32
    return %c0_i32, %c0_i32_0 : i32, i32
  }
  func.func @transform_3(%arg0: i32) -> (i32, i32) {
    %c0_i32 = arith.constant 0 : i32
    %c0_i32_0 = arith.constant 0 : i32
    %c0_i32_1 = arith.constant 0 : i32
    return %c0_i32, %c0_i32_0 : i32, i32
  }
  func.func @transform_4(%arg0: i32) -> (i32, i32) {
    %c0_i32 = arith.constant 0 : i32
    %c0_i32_0 = arith.constant 0 : i32
    return %arg0, %c0_i32 : i32, i32
  }
}

</mosaic_0001>

<llo_original>
// kernel: tpu_custom_call.1
$region0: #{tpu_custom_call.1}
  #allocation0 [shape = 'u32[]', space=smem, size = 0x4, offset = 0x4, fixed_abs, tag = 'smem constant byte address 0x4 - core index']
  #allocation1 [shape = 'u32[72,128]{1,0:T(1,128)}', space=vmem, size = 0x9000, scoped, tag = 'internal scratch']
  %s0 = inlined_call_operand.hbm [shape: f32[8,784], index: 0, kind: input, shape index: {}]
  %s1 = inlined_call_operand.hbm [shape: bf16[784,128], index: 1, kind: input, shape index: {}]
  %s2 = inlined_call_operand.hbm [shape: bf16[128,256], index: 2, kind: input, shape index: {}]
  %s3 = inlined_call_operand.hbm [shape: f32[3,128], index: 3, kind: input, shape index: {}]
  %s4 = inlined_call_operand.hbm [shape: bf16[8,128], index: 4, kind: output, shape index: {}]
  %s5 = sld [smem:[#allocation0]]
  $region42: #{tpu_custom_call.1} parent=0
    _
  %s7 = ssub.s32 1, %s5
  %s8 = scalar_select 0, %s7, %s5
  $region1: #{tpu_custom_call.1} parent=0
    #allocation2 [shape = 'u8[28672]{0}', space=vmem, size = 0x7000, scoped, tag = 'input window, operand 0, single buffered']
    #allocation3 [shape = 's32[1]{0}', space=sflag, size = 0x4, scoped, tag = 'scoped memory for tpu_custom_call.1']
    #allocation4 [shape = 's32[1]{0}', space=sflag, size = 0x4, scoped, tag = 'scoped memory for tpu_custom_call.1']
    #allocation5 [shape = 'u8[200704]{0}', space=vmem, size = 0x31000, scoped, tag = 'input window, operand 1, single buffered']
    #allocation6 [shape = 's32[1]{0}', space=sflag, size = 0x4, scoped, tag = 'scoped memory for tpu_custom_call.1']
    #allocation7 [shape = 'u8[65536]{0}', space=vmem, size = 0x10000, scoped, tag = 'input window, operand 2, single buffered']
    #allocation8 [shape = 'u8[2048]{0}', space=vmem, size = 0x800, scoped, tag = 'input window, operand 3, single buffered']
    #allocation9 [shape = 's32[1]{0}', space=sflag, size = 0x4, scoped, tag = 'scoped memory for tpu_custom_call.1']
    #allocation10 [shape = 'u8[2048]{0}', space=vmem, size = 0x800, scoped, tag = 'output window, operand 0, single buffered']
    %9 = vsyncpa [#allocation3], 0
    %10 = vsyncpa [#allocation6], 0
    %11 = vsyncpa [#allocation9], 0
    %12 = vsyncpa [#allocation4], 0
    // Predicated region
    $region2: #{tpu_custom_call.1} parent=1 // pred_check
      _
    $region3: #{tpu_custom_call.1} parent=1 // pred_check_branch
      %14 = sbr.rel (0) target = $region5
    $region4: #{tpu_custom_call.1} parent=1 // pred_region
      %16 = vsyncadd [#allocation3], 0
      %s18 = sshll.u32 %s0, 4
      %s19 = int_to_ptr.hbm [resolvable:$true] %s18
      %s20 = sshll.u32 [#allocation2], 4
      %s21 = int_to_ptr.vmem [resolvable:$true] %s20
      %23 = dma.hbm_to_vmem [thread:$0]  %s19, 896, %s21, [#allocation3]
    $region5: #{tpu_custom_call.1} parent=1 // pred_fallthru
      _
    // Predicated region
    $region6: #{tpu_custom_call.1} parent=1 // pred_check
      _
    $region7: #{tpu_custom_call.1} parent=1 // pred_check_branch
      %25 = sbr.rel (0) target = $region9
    $region8: #{tpu_custom_call.1} parent=1 // pred_region
      %27 = vsyncadd [#allocation6], 0
      %s28 = sshll.u32 %s1, 4
      %s29 = int_to_ptr.hbm [resolvable:$true] %s28
      %s30 = sshll.u32 [#allocation5], 4
      %s31 = int_to_ptr.vmem [resolvable:$true] %s30
      %36 = dma.hbm_to_vmem [thread:$0]  %s29, 6272, %s31, [#allocation6], 64, 64, 4
    $region9: #{tpu_custom_call.1} parent=1 // pred_fallthru
      _
    // Predicated region
    $region10: #{tpu_custom_call.1} parent=1 // pred_check
      _
    $region11: #{tpu_custom_call.1} parent=1 // pred_check_branch
      %38 = sbr.rel (0) target = $region13
    $region12: #{tpu_custom_call.1} parent=1 // pred_region
      %40 = vsyncadd [#allocation6], 0
      %s41 = sshll.u32 %s2, 4
      %s42 = int_to_ptr.hbm [resolvable:$true] %s41
      %s43 = sshll.u32 [#allocation7], 4
      %s44 = int_to_ptr.vmem [resolvable:$true] %s43
      %49 = dma.hbm_to_vmem [thread:$0]  %s42, 2048, %s44, [#allocation6], 128, 128, 8
    $region13: #{tpu_custom_call.1} parent=1 // pred_fallthru
      _
    // Predicated region
    $region14: #{tpu_custom_call.1} parent=1 // pred_check
      _
    $region15: #{tpu_custom_call.1} parent=1 // pred_check_branch
      %51 = sbr.rel (0) target = $region17
    $region16: #{tpu_custom_call.1} parent=1 // pred_region
      %53 = vsyncadd [#allocation9], 0
      %s55 = sshll.u32 %s3, 4
      %s56 = int_to_ptr.hbm [resolvable:$true] %s55
      %s57 = sshll.u32 [#allocation8], 4
      %s58 = int_to_ptr.vmem [resolvable:$true] %s57
      %60 = dma.hbm_to_vmem [thread:$0]  %s56, 64, %s58, [#allocation9]
    $region17: #{tpu_custom_call.1} parent=1 // pred_fallthru
      _
    // Predicated region
    $region18: #{tpu_custom_call.1} parent=1 // pred_check
      _
    $region19: #{tpu_custom_call.1} parent=1 // pred_check_branch
      %62 = sbr.rel (0) target = $region21
    $region20: #{tpu_custom_call.1} parent=1 // pred_region
      %64 = dma.done [#allocation3], 896
    $region21: #{tpu_custom_call.1} parent=1 // pred_fallthru
      _
    // Predicated region
    $region22: #{tpu_custom_call.1} parent=1 // pred_check
      _
    $region23: #{tpu_custom_call.1} parent=1 // pred_check_branch
      %66 = sbr.rel (0) target = $region25
    $region24: #{tpu_custom_call.1} parent=1 // pred_region
      %68 = dma.done [#allocation6], 6272
    $region25: #{tpu_custom_call.1} parent=1 // pred_fallthru
      _
    // Predicated region
    $region26: #{tpu_custom_call.1} parent=1 // pred_check
      _
    $region27: #{tpu_custom_call.1} parent=1 // pred_check_branch
      %70 = sbr.rel (0) target = $region29
    $region28: #{tpu_custom_call.1} parent=1 // pred_region
      %72 = dma.done [#allocation6], 2048
    $region29: #{tpu_custom_call.1} parent=1 // pred_fallthru
      _
    // Predicated region
    $region30: #{tpu_custom_call.1} parent=1 // pred_check
      _
    $region31: #{tpu_custom_call.1} parent=1 // pred_check_branch
      %74 = sbr.rel (0) target = $region33
    $region32: #{tpu_custom_call.1} parent=1 // pred_region
      %76 = dma.done [#allocation9], 64
    $region33: #{tpu_custom_call.1} parent=1 // pred_fallthru
      _
    %v78 = vld [vmem:[#allocation2] sm:$0xff]
    %v79 = vld [vmem:[#allocation2 + $0x8] sm:$0xff]
    %v80 = vld [vmem:[#allocation2 + $0x10] sm:$0xff]
    %v81 = vld [vmem:[#allocation2 + $0x18] sm:$0xff]
    %v82 = vld [vmem:[#allocation2 + $0x20] sm:$0xff]
    %v83 = vld [vmem:[#allocation2 + $0x28] sm:$0xff]
    %v84 = vld [vmem:[#allocation2 + $0x30] sm:$0xff]
    %v85 = vpack.c.bf16 %v78, %v78
    %v86 = vpack.c.bf16 %v79, %v79
    %v87 = vpack.c.bf16 %v80, %v80
    %v88 = vpack.c.bf16 %v81, %v81
    %v89 = vpack.c.bf16 %v82, %v82
    %v90 = vpack.c.bf16 %v83, %v83
    %v91 = vpack.c.bf16 %v84, %v84
    %v92 = vld [vmem:[#allocation8] sm:$0x7]
    %v93 = vld [vmem:[#allocation5] sm:$0xf]
    %v94 = vld [vmem:[#allocation5 + $0x4] sm:$0xf]
    %v95 = vld [vmem:[#allocation5 + $0x8] sm:$0xf]
    %v96 = vld [vmem:[#allocation5 + $0xc] sm:$0xf]
    %v97 = vld [vmem:[#allocation5 + $0x10] sm:$0xf]
    %v98 = vld [vmem:[#allocation5 + $0x14] sm:$0xf]
    %v99 = vld [vmem:[#allocation5 + $0x18] sm:$0xf]
    %v100 = vld [vmem:[#allocation5 + $0x1c] sm:$0xf]
    %v101 = vld [vmem:[#allocation5 + $0x20] sm:$0xf]
    %v102 = vld [vmem:[#allocation5 + $0x24] sm:$0xf]
    %v103 = vld [vmem:[#allocation5 + $0x28] sm:$0xf]
    %v104 = vld [vmem:[#allocation5 + $0x2c] sm:$0xf]
    %v105 = vld [vmem:[#allocation5 + $0x30] sm:$0xf]
    %v106 = vld [vmem:[#allocation5 + $0x34] sm:$0xf]
    %v107 = vld [vmem:[#allocation5 + $0x38] sm:$0xf]
    %v108 = vld [vmem:[#allocation5 + $0x3c] sm:$0xf]
    %v109 = vld [vmem:[#allocation5 + $0x40] sm:$0xf]
    %v110 = vld [vmem:[#allocation5 + $0x44] sm:$0xf]
    %v111 = vld [vmem:[#allocation5 + $0x48] sm:$0xf]
    %v112 = vld [vmem:[#allocation5 + $0x4c] sm:$0xf]
    %v113 = vld [vmem:[#allocation5 + $0x50] sm:$0xf]
    %v114 = vld [vmem:[#allocation5 + $0x54] sm:$0xf]
    %v115 = vld [vmem:[#allocation5 + $0x58] sm:$0xf]
    %v116 = vld [vmem:[#allocation5 + $0x5c] sm:$0xf]
    %v117 = vld [vmem:[#allocation5 + $0x60] sm:$0xf]
    %v118 = vld [vmem:[#allocation5 + $0x64] sm:$0xf]
    %v119 = vld [vmem:[#allocation5 + $0x68] sm:$0xf]
    %v120 = vld [vmem:[#allocation5 + $0x6c] sm:$0xf]
    %v121 = vld [vmem:[#allocation5 + $0x70] sm:$0xf]
    %v122 = vld [vmem:[#allocation5 + $0x74] sm:$0xf]
    %v123 = vld [vmem:[#allocation5 + $0x78] sm:$0xf]
    %v124 = vld [vmem:[#allocation5 + $0x7c] sm:$0xf]
    %v125 = vld [vmem:[#allocation5 + $0x80] sm:$0xf]
    %v126 = vld [vmem:[#allocation5 + $0x84] sm:$0xf]
    %v127 = vld [vmem:[#allocation5 + $0x88] sm:$0xf]
    %v128 = vld [vmem:[#allocation5 + $0x8c] sm:$0xf]
    %v129 = vld [vmem:[#allocation5 + $0x90] sm:$0xf]
    %v130 = vld [vmem:[#allocation5 + $0x94] sm:$0xf]
    %v131 = vld [vmem:[#allocation5 + $0x98] sm:$0xf]
    %v132 = vld [vmem:[#allocation5 + $0x9c] sm:$0xf]
    %v133 = vld [vmem:[#allocation5 + $0xa0] sm:$0xf]
    %v134 = vld [vmem:[#allocation5 + $0xa4] sm:$0xf]
    %v135 = vld [vmem:[#allocation5 + $0xa8] sm:$0xf]
    %v136 = vld [vmem:[#allocation5 + $0xac] sm:$0xf]
    %v137 = vld [vmem:[#allocation5 + $0xb0] sm:$0xf]
    %v138 = vld [vmem:[#allocation5 + $0xb4] sm:$0xf]
    %v139 = vld [vmem:[#allocation5 + $0xb8] sm:$0xf]
    %v140 = vld [vmem:[#allocation5 + $0xbc] sm:$0xf]
    %v141 = vld [vmem:[#allocation5 + $0xc0] sm:$0xf]
    %v142 = vld [vmem:[#allocation5 + $0xc4] sm:$0xf]
    %v143 = vld [vmem:[#allocation5 + $0xc8] sm:$0xf]
    %v144 = vld [vmem:[#allocation5 + $0xcc] sm:$0xf]
    %v145 = vld [vmem:[#allocation5 + $0xd0] sm:$0xf]
    %v146 = vld [vmem:[#allocation5 + $0xd4] sm:$0xf]
    %v147 = vld [vmem:[#allocation5 + $0xd8] sm:$0xf]
    %v148 = vld [vmem:[#allocation5 + $0xdc] sm:$0xf]
    %v149 = vld [vmem:[#allocation5 + $0xe0] sm:$0xf]
    %v150 = vld [vmem:[#allocation5 + $0xe4] sm:$0xf]
    %v151 = vld [vmem:[#allocation5 + $0xe8] sm:$0xf]
    %v152 = vld [vmem:[#allocation5 + $0xec] sm:$0xf]
    %v153 = vld [vmem:[#allocation5 + $0xf0] sm:$0xf]
    %v154 = vld [vmem:[#allocation5 + $0xf4] sm:$0xf]
    %v155 = vld [vmem:[#allocation5 + $0xf8] sm:$0xf]
    %v156 = vld [vmem:[#allocation5 + $0xfc] sm:$0xf]
    %v157 = vld [vmem:[#allocation5 + $0x100] sm:$0xf]
    %v158 = vld [vmem:[#allocation5 + $0x104] sm:$0xf]
    %v159 = vld [vmem:[#allocation5 + $0x108] sm:$0xf]
    %v160 = vld [vmem:[#allocation5 + $0x10c] sm:$0xf]
    %v161 = vld [vmem:[#allocation5 + $0x110] sm:$0xf]
    %v162 = vld [vmem:[#allocation5 + $0x114] sm:$0xf]
    %v163 = vld [vmem:[#allocation5 + $0x118] sm:$0xf]
    %v164 = vld [vmem:[#allocation5 + $0x11c] sm:$0xf]
    %v165 = vld [vmem:[#allocation5 + $0x120] sm:$0xf]
    %v166 = vld [vmem:[#allocation5 + $0x124] sm:$0xf]
    %v167 = vld [vmem:[#allocation5 + $0x128] sm:$0xf]
    %v168 = vld [vmem:[#allocation5 + $0x12c] sm:$0xf]
    %v169 = vld [vmem:[#allocation5 + $0x130] sm:$0xf]
    %v170 = vld [vmem:[#allocation5 + $0x134] sm:$0xf]
    %v171 = vld [vmem:[#allocation5 + $0x138] sm:$0xf]
    %v172 = vld [vmem:[#allocation5 + $0x13c] sm:$0xf]
    %v173 = vld [vmem:[#allocation5 + $0x140] sm:$0xf]
    %v174 = vld [vmem:[#allocation5 + $0x144] sm:$0xf]
    %v175 = vld [vmem:[#allocation5 + $0x148] sm:$0xf]
    %v176 = vld [vmem:[#allocation5 + $0x14c] sm:$0xf]
    %v177 = vld [vmem:[#allocation5 + $0x150] sm:$0xf]
    %v178 = vld [vmem:[#allocation5 + $0x154] sm:$0xf]
    %v179 = vld [vmem:[#allocation5 + $0x158] sm:$0xf]
    %v180 = vld [vmem:[#allocation5 + $0x15c] sm:$0xf]
    %v181 = vld [vmem:[#allocation5 + $0x160] sm:$0xf]
    %v182 = vld [vmem:[#allocation5 + $0x164] sm:$0xf]
    %v183 = vld [vmem:[#allocation5 + $0x168] sm:$0xf]
    %v184 = vld [vmem:[#allocation5 + $0x16c] sm:$0xf]
    %v185 = vld [vmem:[#allocation5 + $0x170] sm:$0xf]
    %v186 = vld [vmem:[#allocation5 + $0x174] sm:$0xf]
    %v187 = vld [vmem:[#allocation5 + $0x178] sm:$0xf]
    %v188 = vld [vmem:[#allocation5 + $0x17c] sm:$0xf]
    %v189 = vld [vmem:[#allocation5 + $0x180] sm:$0xf]
    %v190 = vld [vmem:[#allocation5 + $0x184] sm:$0xf]
    %v191 = vperm.slane %v92, 0
    %v290 = vunpack.c.l.b16 %v93
    %v291 = vunpack.c.l.b16 %v94
    %v292 = vunpack.c.l.b16 %v95
    %v293 = vunpack.c.l.b16 %v96
    %v294 = vunpack.c.l.b16 %v97
    %v295 = vunpack.c.l.b16 %v98
    %v296 = vunpack.c.l.b16 %v99
    %v297 = vunpack.c.l.b16 %v100
    %v298 = vunpack.c.l.b16 %v101
    %v299 = vunpack.c.l.b16 %v102
    %v300 = vunpack.c.l.b16 %v103
    %v301 = vunpack.c.l.b16 %v104
    %v302 = vunpack.c.l.b16 %v105
    %v303 = vunpack.c.l.b16 %v106
    %v304 = vunpack.c.l.b16 %v107
    %v305 = vunpack.c.l.b16 %v108
    %v306 = vunpack.c.l.b16 %v109
    %v307 = vunpack.c.l.b16 %v110
    %v308 = vunpack.c.l.b16 %v111
    %v309 = vunpack.c.l.b16 %v112
    %v310 = vunpack.c.l.b16 %v113
    %v311 = vunpack.c.l.b16 %v114
    %v312 = vunpack.c.l.b16 %v115
    %v313 = vunpack.c.l.b16 %v116
    %v314 = vunpack.c.l.b16 %v117
    %v315 = vunpack.c.l.b16 %v118
    %v316 = vunpack.c.l.b16 %v119
    %v317 = vunpack.c.l.b16 %v120
    %v318 = vunpack.c.l.b16 %v121
    %v319 = vunpack.c.l.b16 %v122
    %v320 = vunpack.c.l.b16 %v123
    %v321 = vunpack.c.l.b16 %v124
    %v322 = vunpack.c.l.b16 %v125
    %v323 = vunpack.c.l.b16 %v126
    %v324 = vunpack.c.l.b16 %v127
    %v325 = vunpack.c.l.b16 %v128
    %v326 = vunpack.c.l.b16 %v129
    %v327 = vunpack.c.l.b16 %v130
    %v328 = vunpack.c.l.b16 %v131
    %v329 = vunpack.c.l.b16 %v132
    %v330 = vunpack.c.l.b16 %v133
    %v331 = vunpack.c.l.b16 %v134
    %v332 = vunpack.c.l.b16 %v135
    %v333 = vunpack.c.l.b16 %v136
    %v334 = vunpack.c.l.b16 %v137
    %v335 = vunpack.c.l.b16 %v138
    %v336 = vunpack.c.l.b16 %v139
    %v337 = vunpack.c.l.b16 %v140
    %v338 = vunpack.c.l.b16 %v141
    %v339 = vunpack.c.l.b16 %v142
    %v340 = vunpack.c.l.b16 %v143
    %v341 = vunpack.c.l.b16 %v144
    %v342 = vunpack.c.l.b16 %v145
    %v343 = vunpack.c.l.b16 %v146
    %v344 = vunpack.c.l.b16 %v147
    %v345 = vunpack.c.l.b16 %v148
    %v346 = vunpack.c.l.b16 %v149
    %v347 = vunpack.c.l.b16 %v150
    %v348 = vunpack.c.l.b16 %v151
    %v349 = vunpack.c.l.b16 %v152
    %v350 = vunpack.c.l.b16 %v153
    %v351 = vunpack.c.l.b16 %v154
    %v352 = vunpack.c.l.b16 %v155
    %v353 = vunpack.c.l.b16 %v156
    %v354 = vunpack.c.l.b16 %v157
    %v355 = vunpack.c.l.b16 %v158
    %v356 = vunpack.c.l.b16 %v159
    %v357 = vunpack.c.l.b16 %v160
    %v358 = vunpack.c.l.b16 %v161
    %v359 = vunpack.c.l.b16 %v162
    %v360 = vunpack.c.l.b16 %v163
    %v361 = vunpack.c.l.b16 %v164
    %v362 = vunpack.c.l.b16 %v165
    %v363 = vunpack.c.l.b16 %v166
    %v364 = vunpack.c.l.b16 %v167
    %v365 = vunpack.c.l.b16 %v168
    %v366 = vunpack.c.l.b16 %v169
    %v367 = vunpack.c.l.b16 %v170
    %v368 = vunpack.c.l.b16 %v171
    %v369 = vunpack.c.l.b16 %v172
    %v370 = vunpack.c.l.b16 %v173
    %v371 = vunpack.c.l.b16 %v174
    %v372 = vunpack.c.l.b16 %v175
    %v373 = vunpack.c.l.b16 %v176
    %v374 = vunpack.c.l.b16 %v177
    %v375 = vunpack.c.l.b16 %v178
    %v376 = vunpack.c.l.b16 %v179
    %v377 = vunpack.c.l.b16 %v180
    %v378 = vunpack.c.l.b16 %v181
    %v379 = vunpack.c.l.b16 %v182
    %v380 = vunpack.c.l.b16 %v183
    %v381 = vunpack.c.l.b16 %v184
    %v382 = vunpack.c.l.b16 %v185
    %v383 = vunpack.c.l.b16 %v186
    %v384 = vunpack.c.l.b16 %v187
    %v385 = vunpack.c.l.b16 %v188
    %v386 = vunpack.c.l.b16 %v189
    %v387 = vunpack.c.l.b16 %v190
    %v388 = vpack.c.b16 %v291, %v290
    %v389 = vpack.c.b16 %v293, %v292
    %v390 = vpack.c.b16 %v295, %v294
    %v391 = vpack.c.b16 %v297, %v296
    %v392 = vpack.c.b16 %v299, %v298
    %v393 = vpack.c.b16 %v301, %v300
    %v394 = vpack.c.b16 %v303, %v302
    %v395 = vpack.c.b16 %v305, %v304
    %v396 = vpack.c.b16 %v307, %v306
    %v397 = vpack.c.b16 %v309, %v308
    %v398 = vpack.c.b16 %v311, %v310
    %v399 = vpack.c.b16 %v313, %v312
    %v400 = vpack.c.b16 %v315, %v314
    %v401 = vpack.c.b16 %v317, %v316
    %v402 = vpack.c.b16 %v319, %v318
    %v403 = vpack.c.b16 %v321, %v320
    %v404 = vpack.c.b16 %v323, %v322
    %v405 = vpack.c.b16 %v325, %v324
    %v406 = vpack.c.b16 %v327, %v326
    %v407 = vpack.c.b16 %v329, %v328
    %v408 = vpack.c.b16 %v331, %v330
    %v409 = vpack.c.b16 %v333, %v332
    %v410 = vpack.c.b16 %v335, %v334
    %v411 = vpack.c.b16 %v337, %v336
    %v412 = vpack.c.b16 %v339, %v338
    %v413 = vpack.c.b16 %v341, %v340
    %v414 = vpack.c.b16 %v343, %v342
    %v415 = vpack.c.b16 %v345, %v344
    %v416 = vpack.c.b16 %v347, %v346
    %v417 = vpack.c.b16 %v349, %v348
    %v418 = vpack.c.b16 %v351, %v350
    %v419 = vpack.c.b16 %v353, %v352
    %v420 = vpack.c.b16 %v355, %v354
    %v421 = vpack.c.b16 %v357, %v356
    %v422 = vpack.c.b16 %v359, %v358
    %v423 = vpack.c.b16 %v361, %v360
    %v424 = vpack.c.b16 %v363, %v362
    %v425 = vpack.c.b16 %v365, %v364
    %v426 = vpack.c.b16 %v367, %v366
    %v427 = vpack.c.b16 %v369, %v368
    %v428 = vpack.c.b16 %v371, %v370
    %v429 = vpack.c.b16 %v373, %v372
    %v430 = vpack.c.b16 %v375, %v374
    %v431 = vpack.c.b16 %v377, %v376
    %v432 = vpack.c.b16 %v379, %v378
    %v433 = vpack.c.b16 %v381, %v380
    %v434 = vpack.c.b16 %v383, %v382
    %v435 = vpack.c.b16 %v385, %v384
    %v436 = vpack.c.b16 %v387, %v386
    %vm486 = vcmask 130048
    %v488 = vsel %vm486, %v91, 0
    %490 = vmatpush.bf16.msra.mxu0 %v395
    %491 = vmatpush.bf16.msra.mxu0 %v394
    %492 = vmatpush.bf16.msra.mxu0 %v393
    %493 = vmatpush.bf16.msra.mxu0 %v392
    %494 = vmatpush.bf16.msra.mxu0 %v391
    %495 = vmatpush.bf16.msra.mxu0 %v390
    %496 = vmatpush.bf16.msra.mxu0 %v389
    %497 = vmatpush.bf16.msra.mxu0 %v388
    %498 = vmatmul.bf16.gmra.mxu0 %v85
    %v499 = vpop.f32.mrf.mxu0
    %v500 = vadd.f32 %v191, %v499
    %v501 = vpop.f32.mrf.mxu0
    %502 = vdwg.mxu0
    %503 = vmatpush.bf16.msra.mxu0 %v403
    %504 = vmatpush.bf16.msra.mxu0 %v402
    %505 = vmatpush.bf16.msra.mxu0 %v401
    %506 = vmatpush.bf16.msra.mxu0 %v400
    %507 = vmatpush.bf16.msra.mxu0 %v399
    %508 = vmatpush.bf16.msra.mxu0 %v398
    %509 = vmatpush.bf16.msra.mxu0 %v397
    %510 = vmatpush.bf16.msra.mxu0 %v396
    %511 = vmatmul.bf16.gmra.mxu0 %v86
    %v512 = vpop.f32.mrf.mxu0
    %v513 = vadd.f32 %v500, %v512
    %v514 = vpop.f32.mrf.mxu0
    %515 = vdwg.mxu0
    %516 = vmatpush.bf16.msra.mxu0 %v411
    %517 = vmatpush.bf16.msra.mxu0 %v410
    %518 = vmatpush.bf16.msra.mxu0 %v409
    %519 = vmatpush.bf16.msra.mxu0 %v408
    %520 = vmatpush.bf16.msra.mxu0 %v407
    %521 = vmatpush.bf16.msra.mxu0 %v406
    %522 = vmatpush.bf16.msra.mxu0 %v405
    %523 = vmatpush.bf16.msra.mxu0 %v404
    %524 = vmatmul.bf16.gmra.mxu0 %v87
    %v525 = vpop.f32.mrf.mxu0
    %v526 = vadd.f32 %v513, %v525
    %v527 = vpop.f32.mrf.mxu0
    %528 = vdwg.mxu0
    %529 = vmatpush.bf16.msra.mxu0 %v419
    %530 = vmatpush.bf16.msra.mxu0 %v418
    %531 = vmatpush.bf16.msra.mxu0 %v417
    %532 = vmatpush.bf16.msra.mxu0 %v416
    %533 = vmatpush.bf16.msra.mxu0 %v415
    %534 = vmatpush.bf16.msra.mxu0 %v414
    %535 = vmatpush.bf16.msra.mxu0 %v413
    %536 = vmatpush.bf16.msra.mxu0 %v412
    %537 = vmatmul.bf16.gmra.mxu0 %v88
    %v538 = vpop.f32.mrf.mxu0
    %v539 = vadd.f32 %v526, %v538
    %v540 = vpop.f32.mrf.mxu0
    %541 = vdwg.mxu0
    %542 = vmatpush.bf16.msra.mxu0 %v427
    %543 = vmatpush.bf16.msra.mxu0 %v426
    %544 = vmatpush.bf16.msra.mxu0 %v425
    %545 = vmatpush.bf16.msra.mxu0 %v424
    %546 = vmatpush.bf16.msra.mxu0 %v423
    %547 = vmatpush.bf16.msra.mxu0 %v422
    %548 = vmatpush.bf16.msra.mxu0 %v421
    %549 = vmatpush.bf16.msra.mxu0 %v420
    %550 = vmatmul.bf16.gmra.mxu0 %v89
    %v551 = vpop.f32.mrf.mxu0
    %v552 = vadd.f32 %v539, %v551
    %v553 = vpop.f32.mrf.mxu0
    %554 = vdwg.mxu0
    %555 = vmatpush.bf16.msra.mxu0 %v435
    %556 = vmatpush.bf16.msra.mxu0 %v434
    %557 = vmatpush.bf16.msra.mxu0 %v433
    %558 = vmatpush.bf16.msra.mxu0 %v432
    %559 = vmatpush.bf16.msra.mxu0 %v431
    %560 = vmatpush.bf16.msra.mxu0 %v430
    %561 = vmatpush.bf16.msra.mxu0 %v429
    %562 = vmatpush.bf16.msra.mxu0 %v428
    %563 = vmatmul.bf16.gmra.mxu0 %v90
    %v564 = vpop.f32.mrf.mxu0
    %v565 = vadd.f32 %v552, %v564
    %v566 = vpop.f32.mrf.mxu0
    %567 = vdwg.mxu0
    %568 = vmatpush.bf16.msra.mxu0 0
    %569 = vmatpush.bf16.msra.mxu0 0
    %570 = vmatpush.bf16.msra.mxu0 0
    %571 = vmatpush.bf16.msra.mxu0 0
    %572 = vmatpush.bf16.msra.mxu0 0
    %573 = vmatpush.bf16.msra.mxu0 0
    %574 = vmatpush.bf16.msra.mxu0 0
    %575 = vmatpush.bf16.msra.mxu0 %v436
    %576 = vmatmul.bf16.gmra.mxu0 %v488
    %v577 = vpop.f32.mrf.mxu0
    %v578 = vadd.f32 %v565, %v577
    %v579 = vpop.f32.mrf.mxu0
    %580 = vdwg.mxu0
    %v581 = vmax.f32 %v578, 0.0
    %v582 = vpack.c.bf16 %v581, %v581
    %v583 = vld [vmem:[#allocation7] sm:$0xf]
    %v584 = vld [vmem:[#allocation7 + $0x8] sm:$0xf]
    %v585 = vld [vmem:[#allocation7 + $0x10] sm:$0xf]
    %v586 = vld [vmem:[#allocation7 + $0x18] sm:$0xf]
    %v587 = vld [vmem:[#allocation7 + $0x20] sm:$0xf]
    %v588 = vld [vmem:[#allocation7 + $0x28] sm:$0xf]
    %v589 = vld [vmem:[#allocation7 + $0x30] sm:$0xf]
    %v590 = vld [vmem:[#allocation7 + $0x38] sm:$0xf]
    %v591 = vld [vmem:[#allocation7 + $0x40] sm:$0xf]
    %v592 = vld [vmem:[#allocation7 + $0x48] sm:$0xf]
    %v593 = vld [vmem:[#allocation7 + $0x50] sm:$0xf]
    %v594 = vld [vmem:[#allocation7 + $0x58] sm:$0xf]
    %v595 = vld [vmem:[#allocation7 + $0x60] sm:$0xf]
    %v596 = vld [vmem:[#allocation7 + $0x68] sm:$0xf]
    %v597 = vld [vmem:[#allocation7 + $0x70] sm:$0xf]
    %v598 = vld [vmem:[#allocation7 + $0x78] sm:$0xf]
    %v599 = vperm.slane %v92, 1
    %v616 = vunpack.c.l.b16 %v583
    %v617 = vunpack.c.l.b16 %v584
    %v618 = vunpack.c.l.b16 %v585
    %v619 = vunpack.c.l.b16 %v586
    %v620 = vunpack.c.l.b16 %v587
    %v621 = vunpack.c.l.b16 %v588
    %v622 = vunpack.c.l.b16 %v589
    %v623 = vunpack.c.l.b16 %v590
    %v624 = vunpack.c.l.b16 %v591
    %v625 = vunpack.c.l.b16 %v592
    %v626 = vunpack.c.l.b16 %v593
    %v627 = vunpack.c.l.b16 %v594
    %v628 = vunpack.c.l.b16 %v595
    %v629 = vunpack.c.l.b16 %v596
    %v630 = vunpack.c.l.b16 %v597
    %v631 = vunpack.c.l.b16 %v598
    %v632 = vpack.c.b16 %v617, %v616
    %v633 = vpack.c.b16 %v619, %v618
    %v634 = vpack.c.b16 %v621, %v620
    %v635 = vpack.c.b16 %v623, %v622
    %v636 = vpack.c.b16 %v625, %v624
    %v637 = vpack.c.b16 %v627, %v626
    %v638 = vpack.c.b16 %v629, %v628
    %v639 = vpack.c.b16 %v631, %v630
    %648 = vmatpush.bf16.msra.mxu0 %v639
    %649 = vmatpush.bf16.msra.mxu0 %v638
    %650 = vmatpush.bf16.msra.mxu0 %v637
    %651 = vmatpush.bf16.msra.mxu0 %v636
    %652 = vmatpush.bf16.msra.mxu0 %v635
    %653 = vmatpush.bf16.msra.mxu0 %v634
    %654 = vmatpush.bf16.msra.mxu0 %v633
    %655 = vmatpush.bf16.msra.mxu0 %v632
    %656 = vmatmul.bf16.gmra.mxu0 %v582
    %v657 = vpop.f32.mrf.mxu0
    %v658 = vadd.f32 %v599, %v657
    %v659 = vpop.f32.mrf.mxu0
    %660 = vdwg.mxu0
    %v661 = vmax.f32 %v658, 0.0
    %v662 = vpack.c.bf16 %v661, %v661
    %v663 = vld [vmem:[#allocation7 + $0x4] sm:$0xf]
    %v664 = vld [vmem:[#allocation7 + $0xc] sm:$0xf]
    %v665 = vld [vmem:[#allocation7 + $0x14] sm:$0xf]
    %v666 = vld [vmem:[#allocation7 + $0x1c] sm:$0xf]
    %v667 = vld [vmem:[#allocation7 + $0x24] sm:$0xf]
    %v668 = vld [vmem:[#allocation7 + $0x2c] sm:$0xf]
    %v669 = vld [vmem:[#allocation7 + $0x34] sm:$0xf]
    %v670 = vld [vmem:[#allocation7 + $0x3c] sm:$0xf]
    %v671 = vld [vmem:[#allocation7 + $0x44] sm:$0xf]
    %v672 = vld [vmem:[#allocation7 + $0x4c] sm:$0xf]
    %v673 = vld [vmem:[#allocation7 + $0x54] sm:$0xf]
    %v674 = vld [vmem:[#allocation7 + $0x5c] sm:$0xf]
    %v675 = vld [vmem:[#allocation7 + $0x64] sm:$0xf]
    %v676 = vld [vmem:[#allocation7 + $0x6c] sm:$0xf]
    %v677 = vld [vmem:[#allocation7 + $0x74] sm:$0xf]
    %v678 = vld [vmem:[#allocation7 + $0x7c] sm:$0xf]
    %v679 = vperm.slane %v92, 2
    %v696 = vunpack.c.l.b16 %v663
    %v697 = vunpack.c.l.b16 %v664
    %v698 = vunpack.c.l.b16 %v665
    %v699 = vunpack.c.l.b16 %v666
    %v700 = vunpack.c.l.b16 %v667
    %v701 = vunpack.c.l.b16 %v668
    %v702 = vunpack.c.l.b16 %v669
    %v703 = vunpack.c.l.b16 %v670
    %v704 = vunpack.c.l.b16 %v671
    %v705 = vunpack.c.l.b16 %v672
    %v706 = vunpack.c.l.b16 %v673
    %v707 = vunpack.c.l.b16 %v674
    %v708 = vunpack.c.l.b16 %v675
    %v709 = vunpack.c.l.b16 %v676
    %v710 = vunpack.c.l.b16 %v677
    %v711 = vunpack.c.l.b16 %v678
    %v712 = vpack.c.b16 %v697, %v696
    %v713 = vpack.c.b16 %v699, %v698
    %v714 = vpack.c.b16 %v701, %v700
    %v715 = vpack.c.b16 %v703, %v702
    %v716 = vpack.c.b16 %v705, %v704
    %v717 = vpack.c.b16 %v707, %v706
    %v718 = vpack.c.b16 %v709, %v708
    %v719 = vpack.c.b16 %v711, %v710
    %728 = vmatpush.bf16.msra.mxu0 %v719
    %729 = vmatpush.bf16.msra.mxu0 %v718
    %730 = vmatpush.bf16.msra.mxu0 %v717
    %731 = vmatpush.bf16.msra.mxu0 %v716
    %732 = vmatpush.bf16.msra.mxu0 %v715
    %733 = vmatpush.bf16.msra.mxu0 %v714
    %734 = vmatpush.bf16.msra.mxu0 %v713
    %735 = vmatpush.bf16.msra.mxu0 %v712
    %736 = vmatmul.bf16.gmra.mxu0 %v662
    %v737 = vpop.f32.mrf.mxu0
    %v738 = vadd.f32 %v679, %v737
    %v739 = vpop.f32.mrf.mxu0
    %740 = vdwg.mxu0
    %v741 = vpack.c.bf16 %v738, %v738
    %742 = vst [vmem:[#allocation10] sm:$0xf] %v741
    // Predicated region
    $region34: #{tpu_custom_call.1} parent=1 // pred_check
      _
    $region35: #{tpu_custom_call.1} parent=1 // pred_check_branch
      %744 = sbr.rel (0) target = $region37
    $region36: #{tpu_custom_call.1} parent=1 // pred_region
      %746 = vsyncadd [#allocation4], 0
      %s748 = sshll.u32 [#allocation10], 4
      %s749 = int_to_ptr.vmem [resolvable:$true] %s748
      %s750 = sshll.u32 %s4, 4
      %s751 = int_to_ptr.hbm [resolvable:$true] %s750
      %753 = dma.vmem_to_hbm [thread:$0]  %s749, 64, %s751, [#allocation4]
    $region37: #{tpu_custom_call.1} parent=1 // pred_fallthru
      _
    // Predicated region
    $region38: #{tpu_custom_call.1} parent=1 // pred_check
      _
    $region39: #{tpu_custom_call.1} parent=1 // pred_check_branch
      %755 = sbr.rel (0) target = $region41
    $region40: #{tpu_custom_call.1} parent=1 // pred_region
      %757 = dma.done [#allocation4], 64
    $region41: #{tpu_custom_call.1} parent=1 // pred_fallthru
      _
    %758 = vsyncpa [#allocation3], 1
    %759 = vsyncpa [#allocation6], 1
    %760 = vsyncpa [#allocation9], 1
    %761 = vsyncpa [#allocation4], 1

</llo_original>
